<compile_context>
chip_gen: v7x
topology: tpu7x:2x2x1
jax: 0.10.0
libtpu: 0.0.40
codegen_flags: <defaults>
</compile_context>

<pallas_src>
import functools

import jax
import jax.numpy as jnp
from jax import lax
from jax.experimental import pallas as pl
from jax.experimental.pallas import tpu as pltpu

_LOG2E = 1.4426950408889634


# ----------------------------------------------------------------------------
# Tile selection helper
# ----------------------------------------------------------------------------
def _pick_tile(dim, target, align=128):
    """Largest tile <= target dividing `dim`; prefers multiples of `align`.

    Falls back to the full dim (a full-extent block is always legal w.r.t. the
    (8,128) tiling rule) when the dim is small or no aligned divisor exists.
    """
    if dim <= target:
        return dim
    t = (target // align) * align
    while t >= align:
        if dim % t == 0:
            return t
        t -= align
    return dim


# ----------------------------------------------------------------------------
# Tiled matmul + bias kernel (qkv_proj and output_proj), bf16 MXU / f32 acc
# ----------------------------------------------------------------------------
def _matmul_bias_kernel(x_ref, w_ref, b_ref, o_ref, acc_ref):
    # x: (tm, tk) bf16, w: (tk, tn) bf16, b: (1, tn) f32, o: (tm, tn), acc f32
    @pl.when(pl.program_id(2) == 0)
    def _():
        acc_ref[...] = jnp.zeros_like(acc_ref)

    acc_ref[...] += jnp.dot(x_ref[...], w_ref[...],
                            preferred_element_type=jnp.float32)

    @pl.when(pl.program_id(2) == pl.num_programs(2) - 1)
    def _():
        o_ref[...] = (acc_ref[...] + b_ref[...]).astype(o_ref.dtype)


def matmul_bias(x2d, w, b, *, out_dtype=None,
                tm_target=512, tn_target=512, tk_target=1024):
    """y = x2d @ w + b   (x2d: (M,K), w: (K,O), b: (O,)); bf16 MXU, f32 acc."""
    M, K = x2d.shape
    O = w.shape[1]
    if out_dtype is None:
        out_dtype = x2d.dtype
    tm = _pick_tile(M, tm_target)
    tn = _pick_tile(O, tn_target)
    tk = _pick_tile(K, tk_target)

    x_bf = x2d.astype(jnp.bfloat16)
    w_bf = w.astype(jnp.bfloat16)
    b2d = b.astype(jnp.float32).reshape(1, O)

    grid = (M // tm, O // tn, K // tk)
    return pl.pallas_call(
        _matmul_bias_kernel,
        out_shape=jax.ShapeDtypeStruct((M, O), out_dtype),
        grid=grid,
        in_specs=[
            pl.BlockSpec((tm, tk), lambda i, j, k: (i, k)),
            pl.BlockSpec((tk, tn), lambda i, j, k: (k, j)),
            pl.BlockSpec((1, tn), lambda i, j, k: (0, j)),
        ],
        out_specs=pl.BlockSpec((tm, tn), lambda i, j, k: (i, j)),
        scratch_shapes=[pltpu.VMEM((tm, tn), jnp.float32)],
        compiler_params=pltpu.CompilerParams(
            dimension_semantics=("parallel", "parallel", "arbitrary")),
    )(x_bf, w_bf, b2d)


# ----------------------------------------------------------------------------
# Flash attention kernel: head-packed layout, all heads per grid step,
# exp2 online softmax, bf16 MXU / f32 statistics.
# ----------------------------------------------------------------------------
def _flash_attn_kernel(q_ref, k_ref, v_ref, o_ref, m_sc, l_sc, acc_sc, *,
                       n_heads, head_dim):
    # q_ref/o_ref: (1, tq, nh*D); k_ref/v_ref: (1, tkv, nh*D)
    # m_sc/l_sc: (tq, nh) f32; acc_sc: (tq, nh*D) f32
    kv = pl.program_id(2)
    nh, D = n_heads, head_dim

    @pl.when(kv == 0)
    def _():
        m_sc[...] = jnp.full_like(m_sc, -jnp.inf)
        l_sc[...] = jnp.zeros_like(l_sc)
        acc_sc[...] = jnp.zeros_like(acc_sc)

    # Q already carries head_dim**-0.5 * log2(e) (folded into w_qkv outside).
    q_all = q_ref[0]            # (tq,  nh*D) bf16
    k_all = k_ref[0]            # (tkv, nh*D) bf16
    v_all = v_ref[0]            # (tkv, nh*D) bf16
    m_all = m_sc[...]           # (tq, nh)  f32
    l_all = l_sc[...]           # (tq, nh)  f32
    acc_all = acc_sc[...]       # (tq, nh*D) f32

    m_cols, l_cols, acc_cols = [], [], []
    for h in range(nh):                       # static unroll over heads
        sl = slice(h * D, (h + 1) * D)
        q_h, k_h, v_h = q_all[:, sl], k_all[:, sl], v_all[:, sl]

        # NT matmul: contract last dims directly, no explicit k.T relayout.
        s = lax.dot_general(q_h, k_h, (((1,), (1,)), ((), ())),
                            preferred_element_type=jnp.float32)   # (tq, tkv)

        m_prev = m_all[:, h:h + 1]                                # (tq, 1)
        m_new = jnp.maximum(m_prev, jnp.max(s, axis=-1, keepdims=True))
        alpha = jnp.exp2(m_prev - m_new)
        p = jnp.exp2(s - m_new)                                   # (tq, tkv)

        l_cols.append(alpha * l_all[:, h:h + 1] +
                      jnp.sum(p, axis=-1, keepdims=True))
        acc_cols.append(alpha * acc_all[:, sl] +
                        jnp.dot(p.astype(v_h.dtype), v_h,
                                preferred_element_type=jnp.float32))
        m_cols.append(m_new)

    # Single dense store per statistic / accumulator (no per-head masked vst).
    m_sc[...] = jnp.concatenate(m_cols, axis=-1) if nh > 1 else m_cols[0]
    l_sc[...] = jnp.concatenate(l_cols, axis=-1) if nh > 1 else l_cols[0]
    acc_sc[...] = jnp.concatenate(acc_cols, axis=-1) if nh > 1 else acc_cols[0]

    @pl.when(kv == pl.num_programs(2) - 1)
    def _():
        l_fin = l_sc[...]
        acc_fin = acc_sc[...]
        o_cols = []
        for h in range(nh):
            inv = pl.reciprocal(l_fin[:, h:h + 1], approx=True)   # EUP slot
            o_cols.append(acc_fin[:, h * D:(h + 1) * D] * inv)
        o_full = jnp.concatenate(o_cols, axis=-1) if nh > 1 else o_cols[0]
        o_ref[0] = o_full.astype(o_ref.dtype)                     # lane-dense


def flash_mha(q, k, v, *, n_heads, head_dim, tq_target=512, tkv_target=256):
    """q,k,v: (B, N, n_heads*head_dim) head-packed -> same shape/dtype out."""
    B, N, att = q.shape
    assert att == n_heads * head_dim
    tq = _pick_tile(N, tq_target)
    tkv = _pick_tile(N, tkv_target)

    q_spec = pl.BlockSpec((1, tq, att), lambda b, qi, ki: (b, qi, 0))
    kv_spec = pl.BlockSpec((1, tkv, att), lambda b, qi, ki: (b, ki, 0))

    return pl.pallas_call(
        functools.partial(_flash_attn_kernel,
                          n_heads=n_heads, head_dim=head_dim),
        out_shape=jax.ShapeDtypeStruct((B, N, att), q.dtype),
        grid=(B, N // tq, N // tkv),
        in_specs=[q_spec, kv_spec, kv_spec],
        out_specs=q_spec,
        scratch_shapes=[
            pltpu.VMEM((tq, n_heads), jnp.float32),   # running max m (per head)
            pltpu.VMEM((tq, n_heads), jnp.float32),   # running sum l (per head)
            pltpu.VMEM((tq, att), jnp.float32),       # output accumulator
        ],
        compiler_params=pltpu.CompilerParams(
            dimension_semantics=("parallel", "parallel", "arbitrary")),
    )(q, k, v)


# ----------------------------------------------------------------------------
# Parameters (matches torch init: xavier_uniform weights, zero bias)
# ----------------------------------------------------------------------------
def xavier_uniform(key, shape):
    fan_out, fan_in = shape                 # torch.nn.Linear.weight = (out, in)
    bound = (6.0 / (fan_in + fan_out)) ** 0.5
    return jax.random.uniform(key, shape, jnp.float32, -bound, bound)


def init_params(key, hidden_size, n_heads, head_dim):
    att_dim = n_heads * head_dim
    k1, k2 = jax.random.split(key)
    w_qkv = xavier_uniform(k1, (3 * hidden_size, hidden_size)).T   # (H, 3H)
    b_qkv = jnp.zeros((3 * hidden_size,), jnp.float32)
    w_out = xavier_uniform(k2, (hidden_size, att_dim)).T           # (att, H)
    b_out = jnp.zeros((hidden_size,), jnp.float32)
    return dict(w_qkv=w_qkv, b_qkv=b_qkv, w_out=w_out, b_out=b_out)


# ----------------------------------------------------------------------------
# Module-equivalent forward
# ----------------------------------------------------------------------------
def attention_forward(params, x, n_heads, head_dim):
    B, N, H = x.shape
    att = n_heads * head_dim
    # TODO(synk): the original module's split-by-att_dim of a 3*hidden_size
    # projection only makes sense when att_dim == hidden_size; enforce it.
    assert att == H, "Attention assumes n_heads*head_dim == hidden_size"

    # Fold softmax scale and log2(e) (exp2 softmax) into the Q columns of the
    # projection -- zero per-token cost, removes per-KV-step rescaling.
    q_factor = (float(head_dim) ** -0.5) * _LOG2E
    w_qkv = jnp.concatenate(
        [params["w_qkv"][:, :att] * q_factor, params["w_qkv"][:, att:]], axis=1)
    b_qkv = jnp.concatenate(
        [params["b_qkv"][:att] * q_factor, params["b_qkv"][att:]])

    # qkv projection (tiled Pallas matmul, bf16 output to halve split traffic)
    qkv = matmul_bias(x.reshape(B * N, H), w_qkv, b_qkv,
                      out_dtype=jnp.bfloat16)               # (B*N, 3*att)
    qkv = qkv.reshape(B, N, 3 * att)
    q, k, v = jnp.split(qkv, [att, 2 * att], axis=-1)       # (B, N, att) each

    # Flash attention over the head-packed layout (no transposes).
    out = flash_mha(q, k, v, n_heads=n_heads, head_dim=head_dim)  # (B,N,att)

    # Output projection (tiled Pallas matmul), back to input dtype.
    out = matmul_bias(out.reshape(B * N, att), params["w_out"], params["b_out"],
                      out_dtype=x.dtype)
    return out.reshape(B, N, H)


# ----------------------------------------------------------------------------
# Pure-JAX f32 reference
# ----------------------------------------------------------------------------
def _reference(params, x, n_heads, head_dim):
    B, N, H = x.shape
    att_dim = n_heads * head_dim
    qkv = x.reshape(B * N, H) @ params["w_qkv"] + params["b_qkv"]
    q, k, v = jnp.split(qkv, [att_dim, 2 * att_dim], axis=-1)
    q = q.reshape(B, N, n_heads, head_dim).transpose(0, 2, 1, 3)
    k = k.reshape(B, N, n_heads, head_dim).transpose(0, 2, 1, 3)
    v = v.reshape(B, N, n_heads, head_dim).transpose(0, 2, 1, 3)
    s = jnp.einsum("bhnd,bhmd->bhnm", q, k) * head_dim ** (-0.5)
    a = jax.nn.softmax(s, axis=-1)
    o = jnp.einsum("bhnm,bhmd->bhnd", a, v)
    o = o.transpose(0, 2, 1, 3).reshape(B * N, att_dim)
    o = o @ params["w_out"] + params["b_out"]
    return o.reshape(B, N, H)


def _check(config, B, N, key, atol=2e-2, rtol=2e-2):
    n_heads, hidden, head_dim = (config["num_heads"], config["hidden_size"],
                                 config["head_dim"])
    k_param, k_x = jax.random.split(key)
    params = init_params(k_param, hidden, n_heads, head_dim)
    x = jax.random.normal(k_x, (B, N, hidden), jnp.float32)

    y = attention_forward(params, x, n_heads, head_dim)
    y = jax.block_until_ready(y)

    # bf16 MXU path vs f32 reference: relaxed tolerance (see perf review).
    y_ref = _reference(params, x, n_heads, head_dim)
    assert jnp.allclose(y, y_ref, atol=atol, rtol=rtol), "mismatch vs reference"


if __name__ == "__main__":
    key = jax.random.PRNGKey(0)
    k1, k2 = jax.random.split(key)

    # Toy config matching the module's small-shape usage.
    _check({"num_heads": 4, "hidden_size": 32, "head_dim": 8}, B=2, N=8, key=k1)

    # Small-but-real config: head_dim=64, multiple KV tiles (exercises the
    # online-softmax rescale path) and lane-dense att=128 outputs.
    _check({"num_heads": 2, "hidden_size": 128, "head_dim": 64},
           B=2, N=512, key=k2)

    print("KERNEL_OK")
</pallas_src>

<mosaic_0001>
module attributes {stable_mosaic.version = 11 : i64} {
  func.func @_matmul_bias_kernel(%arg0: i32, %arg1: i32, %arg2: i32, %arg3: memref<16x32xbf16, #tpu.memory_space<vmem>>, %arg4: memref<32x96xbf16, #tpu.memory_space<vmem>>, %arg5: memref<1x96xf32, #tpu.memory_space<vmem>>, %arg6: memref<16x96xbf16, #tpu.memory_space<vmem>>, %arg7: memref<16x96xf32, #tpu.memory_space<vmem>>) attributes {dimension_semantics = [#tpu.dimension_semantics<parallel>, #tpu.dimension_semantics<parallel>, #tpu.dimension_semantics<arbitrary>], iteration_bounds = array<i64: 1, 1, 1>, scalar_prefetch = 0 : i64, scratch_operands = 1 : i64, tpu.core_type = #tpu.core_type<tc>, window_params = [{transform_indices = @transform_0, window_bounds = array<i64: 16, 32>}, {transform_indices = @transform_1, window_bounds = array<i64: 32, 96>}, {transform_indices = @transform_2, window_bounds = array<i64: 1, 96>}, {transform_indices = @transform_3, window_bounds = array<i64: 16, 96>}]} {
    %c0_i32 = arith.constant 0 : i32
    %0 = arith.cmpi eq, %arg2, %c0_i32 : i32
    %1 = arith.extui %0 : i1 to i32
    %c0_i32_0 = arith.constant 0 : i32
    %2 = arith.cmpi ne, %1, %c0_i32_0 : i32
    scf.if %2 {
      %cst_10 = arith.constant 0.000000e+00 : f32
      %12 = vector.broadcast %cst_10 : f32 to vector<16x96xf32>
      %c0_11 = arith.constant 0 : index
      %c0_12 = arith.constant 0 : index
      %13 = vector.load %arg7[%c0_11, %c0_12] : memref<16x96xf32, #tpu.memory_space<vmem>>, vector<16x96xf32>
      tpu.vector_store %arg7[%c0_11, %c0_12], %12 {strides = array<i32>} : memref<16x96xf32, #tpu.memory_space<vmem>>, vector<16x96xf32>,
    } else {
    }
    %c0 = arith.constant 0 : index
    %c0_1 = arith.constant 0 : index
    %3 = vector.load %arg7[%c0, %c0_1] : memref<16x96xf32, #tpu.memory_space<vmem>>, vector<16x96xf32>
    %c0_2 = arith.constant 0 : index
    %c0_3 = arith.constant 0 : index
    %4 = vector.load %arg3[%c0_2, %c0_3] : memref<16x32xbf16, #tpu.memory_space<vmem>>, vector<16x32xbf16>
    %c0_4 = arith.constant 0 : index
    %c0_5 = arith.constant 0 : index
    %5 = vector.load %arg4[%c0_4, %c0_5] : memref<32x96xbf16, #tpu.memory_space<vmem>>, vector<32x96xbf16>
    %cst = arith.constant dense<0.000000e+00> : vector<16x96xf32>
    %6 = tpu.matmul %4, %5, %cst {dimension_numbers = #tpu.dot_dimension_numbers<[1], [0], [0], [1], [0, 0, 1, 1], [], []>} : vector<16x32xbf16>, vector<32x96xbf16>, vector<16x96xf32> -> vector<16x96xf32>
    %7 = arith.addf %3, %6 : vector<16x96xf32>
    %c0_6 = arith.constant 0 : index
    %c0_7 = arith.constant 0 : index
    %8 = vector.load %arg7[%c0_6, %c0_7] : memref<16x96xf32, #tpu.memory_space<vmem>>, vector<16x96xf32>
    tpu.vector_store %arg7[%c0_6, %c0_7], %7 {strides = array<i32>} : memref<16x96xf32, #tpu.memory_space<vmem>>, vector<16x96xf32>,
    %c0_i32_8 = arith.constant 0 : i32
    %9 = arith.cmpi eq, %arg2, %c0_i32_8 : i32
    %10 = arith.extui %9 : i1 to i32
    %c0_i32_9 = arith.constant 0 : i32
    %11 = arith.cmpi ne, %10, %c0_i32_9 : i32
    scf.if %11 {
      %c0_10 = arith.constant 0 : index
      %c0_11 = arith.constant 0 : index
      %12 = vector.load %arg7[%c0_10, %c0_11] : memref<16x96xf32, #tpu.memory_space<vmem>>, vector<16x96xf32>
      %c0_12 = arith.constant 0 : index
      %c0_13 = arith.constant 0 : index
      %13 = vector.load %arg5[%c0_12, %c0_13] : memref<1x96xf32, #tpu.memory_space<vmem>>, vector<1x96xf32>
      %14 = vector.broadcast %13 : vector<1x96xf32> to vector<16x96xf32>
      %15 = arith.addf %12, %14 : vector<16x96xf32>
      %16 = arith.truncf %15 : vector<16x96xf32> to vector<16x96xbf16>
      %c0_14 = arith.constant 0 : index
      %c0_15 = arith.constant 0 : index
      %17 = vector.load %arg6[%c0_14, %c0_15] : memref<16x96xbf16, #tpu.memory_space<vmem>>, vector<16x96xbf16>
      tpu.vector_store %arg6[%c0_14, %c0_15], %16 {strides = array<i32>} : memref<16x96xbf16, #tpu.memory_space<vmem>>, vector<16x96xbf16>,
    } else {
    }
    return
  }
  func.func @transform_0(%arg0: i32, %arg1: i32, %arg2: i32) -> (i32, i32) {
    %c0_i32 = arith.constant 0 : i32
    return %arg0, %arg2 : i32, i32
  }
  func.func @transform_1(%arg0: i32, %arg1: i32, %arg2: i32) -> (i32, i32) {
    %c0_i32 = arith.constant 0 : i32
    return %arg2, %arg1 : i32, i32
  }
  func.func @transform_2(%arg0: i32, %arg1: i32, %arg2: i32) -> (i32, i32) {
    %c0_i32 = arith.constant 0 : i32
    %c0_i32_0 = arith.constant 0 : i32
    return %c0_i32, %arg1 : i32, i32
  }
  func.func @transform_3(%arg0: i32, %arg1: i32, %arg2: i32) -> (i32, i32) {
    %c0_i32 = arith.constant 0 : i32
    return %arg0, %arg1 : i32, i32
  }
}

</mosaic_0001>

<llo_original>
// kernel: tpu_custom_call.1
$region0: #{tpu_custom_call.1}
  #allocation0 [shape = 'u32[]', space=smem, size = 0x4, offset = 0x4, fixed_abs, tag = 'smem constant byte address 0x4 - core index']
  #allocation1 [shape = 'u32[144,128]{1,0:T(1,128)}', space=vmem, size = 0x12000, scoped, tag = 'internal scratch']
  #allocation2 [shape = 'f32[16,96]{1,0:T(8,128)}', space=vmem, size = 0x2000, scoped, tag = 'scratch operand']
  %s0 = inlined_call_operand.hbm [shape: bf16[16,32], index: 0, kind: input, shape index: {}]
  %s1 = inlined_call_operand.hbm [shape: bf16[32,96], index: 1, kind: input, shape index: {}]
  %s2 = inlined_call_operand.vmem [shape: f32[1,96], index: 2, kind: input, shape index: {}]
  %s3 = inlined_call_operand.hbm [shape: bf16[16,96], index: 3, kind: output, shape index: {}]
  %s4 = sld [smem:[#allocation0]]
  $region38: #{tpu_custom_call.1} parent=0
    _
  %s6 = ssub.s32 1, %s4
  %s7 = scalar_select 0, %s6, %s4
  $region1: #{tpu_custom_call.1} parent=0
    #allocation3 [shape = 'u8[4096]{0}', space=vmem, size = 0x1000, scoped, tag = 'input window, operand 0, single buffered']
    #allocation4 [shape = 's32[1]{0}', space=sflag, size = 0x4, scoped, tag = 'scoped memory for tpu_custom_call.1']
    #allocation5 [shape = 's32[1]{0}', space=sflag, size = 0x4, scoped, tag = 'scoped memory for tpu_custom_call.1']
    #allocation6 [shape = 'u8[8192]{0}', space=vmem, size = 0x2000, scoped, tag = 'input window, operand 1, single buffered']
    #allocation7 [shape = 's32[1]{0}', space=sflag, size = 0x4, scoped, tag = 'scoped memory for tpu_custom_call.1']
    #allocation8 [shape = 'u8[4096]{0}', space=vmem, size = 0x1000, scoped, tag = 'output window, operand 0, single buffered']
    %8 = vsyncpa [#allocation4], 0
    %9 = vsyncpa [#allocation7], 0
    %10 = vsyncpa [#allocation5], 0
    // Predicated region
    $region2: #{tpu_custom_call.1} parent=1 // pred_check
      _
    $region3: #{tpu_custom_call.1} parent=1 // pred_check_branch
      %12 = sbr.rel (0) target = $region5
    $region4: #{tpu_custom_call.1} parent=1 // pred_region
      %s14 = ssub.s32 128, 128
      %15 = vsyncadd [#allocation4], %s14
      %s16 = sshll.u32 [#allocation3], 4
      %s17 = int_to_ptr.vmem [resolvable:$true] %s16
      %22 = dma.hbm_to_vmem [thread:$0]  %s0, 128, %s17, [#allocation4], 64, 64, 4
    $region5: #{tpu_custom_call.1} parent=1 // pred_fallthru
      _
    // Predicated region
    $region6: #{tpu_custom_call.1} parent=1 // pred_check
      _
    $region7: #{tpu_custom_call.1} parent=1 // pred_check_branch
      %24 = sbr.rel (0) target = $region9
    $region8: #{tpu_custom_call.1} parent=1 // pred_region
      %s26 = ssub.s32 256, 256
      %27 = vsyncadd [#allocation7], %s26
      %s28 = sshll.u32 [#allocation6], 4
      %s29 = int_to_ptr.vmem [resolvable:$true] %s28
      %34 = dma.hbm_to_vmem [thread:$0]  %s1, 256, %s29, [#allocation7], 64, 64, 4
    $region9: #{tpu_custom_call.1} parent=1 // pred_fallthru
      _
    // Predicated region
    $region10: #{tpu_custom_call.1} parent=1 // pred_check
      _
    $region11: #{tpu_custom_call.1} parent=1 // pred_check_branch
      %36 = sbr.rel (0) target = $region13
    $region12: #{tpu_custom_call.1} parent=1 // pred_region
      _
    $region13: #{tpu_custom_call.1} parent=1 // pred_fallthru
      _
    // Predicated region
    $region14: #{tpu_custom_call.1} parent=1 // pred_check
      _
    $region15: #{tpu_custom_call.1} parent=1 // pred_check_branch
      %38 = sbr.rel (0) target = $region17
    $region16: #{tpu_custom_call.1} parent=1 // pred_region
      %39 = dma.done [#allocation4], 128
    $region17: #{tpu_custom_call.1} parent=1 // pred_fallthru
      _
    // Predicated region
    $region18: #{tpu_custom_call.1} parent=1 // pred_check
      _
    $region19: #{tpu_custom_call.1} parent=1 // pred_check_branch
      %41 = sbr.rel (0) target = $region21
    $region20: #{tpu_custom_call.1} parent=1 // pred_region
      %42 = dma.done [#allocation7], 256
    $region21: #{tpu_custom_call.1} parent=1 // pred_fallthru
      _
    %p44 = scmp.eq.s32.totalorder 0, 0
    // Predicated region
    $region22: #{tpu_custom_call.1} parent=1 // pred_check
      %p45 = pneg %p44
    $region23: #{tpu_custom_call.1} parent=1 // pred_check_branch
      %47 = sbr.rel (%p45) target = $region25
    $region24: #{tpu_custom_call.1} parent=1 // pred_region
      %vm48 = vcmask 785408
      %49 = vst.msk [vmem:[#allocation2] sm:$0xff] %vm48, 0.0
      %50 = vst.msk [vmem:[#allocation2 + $0x8] sm:$0xff] %vm48, 0.0
    $region25: #{tpu_custom_call.1} parent=1 // pred_fallthru
      _
    %v51 = vld [vmem:[#allocation2] sm:$0xff]
    %v52 = vld [vmem:[#allocation2 + $0x8] sm:$0xff]
    %v53 = vld [vmem:[#allocation3] sm:$0xf]
    %v54 = vld [vmem:[#allocation3 + $0x4] sm:$0xf]
    %v55 = vld [vmem:[#allocation6] sm:$0xf]
    %v56 = vld [vmem:[#allocation6 + $0x4] sm:$0xf]
    %v57 = vld [vmem:[#allocation6 + $0x8] sm:$0xf]
    %v58 = vld [vmem:[#allocation6 + $0xc] sm:$0xf]
    %v61 = vunpack.c.l.b16 %v53
    %v62 = vunpack.c.l.b16 %v54
    %v63 = vpack.c.b16 %v62, %v61
    %v68 = vunpack.c.l.b16 %v55
    %v69 = vunpack.c.l.b16 %v56
    %v70 = vunpack.c.l.b16 %v57
    %v71 = vunpack.c.l.b16 %v58
    %v72 = vpack.c.b16 %v69, %v68
    %v73 = vpack.c.b16 %v71, %v70
    %vm76 = vcmask 261120
    %v78 = vsel %vm76, %v63, 0
    %80 = vmatprep.subr.bf16.mxu0 0
    %81 = vmatpush1.bf16.msra.mxu0 %v72
    %82 = vmatprep.subr.bf16.mxu0 0
    %83 = vmatpush1.bf16.msra.mxu0 %v73
    %84 = vmatprep.subr.bf16.mxu0 0
    %85 = vmatpush1.bf16.msra.mxu0 0
    %86 = vmatprep.subr.bf16.mxu0 0
    %87 = vmatpush1.bf16.msra.mxu0 0
    %88 = vmatprep.subr.bf16.mxu0 0
    %89 = vmatpush1.bf16.msra.mxu0 0
    %90 = vmatprep.subr.bf16.mxu0 0
    %91 = vmatpush1.bf16.msra.mxu0 0
    %92 = vmatprep.subr.bf16.mxu0 0
    %93 = vmatpush1.bf16.msra.mxu0 0
    %94 = vmatprep.subr.bf16.mxu0 0
    %95 = vmatpush1.bf16.msra.mxu0 0
    %96 = vmatprep.subr.bf16.mxu0 0
    %97 = vmatpush1.bf16.msra.mxu0 0
    %98 = vmatprep.subr.bf16.mxu0 0
    %99 = vmatpush1.bf16.msra.mxu0 0
    %100 = vmatprep.subr.bf16.mxu0 0
    %101 = vmatpush1.bf16.msra.mxu0 0
    %102 = vmatprep.subr.bf16.mxu0 0
    %103 = vmatpush1.bf16.msra.mxu0 0
    %104 = vmatprep.subr.bf16.mxu0 0
    %105 = vmatpush1.bf16.msra.mxu0 0
    %106 = vmatprep.subr.bf16.mxu0 0
    %107 = vmatpush1.bf16.msra.mxu0 0
    %108 = vmatprep.subr.bf16.mxu0 0
    %109 = vmatpush1.bf16.msra.mxu0 0
    %110 = vmatprep.subr.bf16.mxu0 0
    %111 = vmatpush1.bf16.msra.mxu0 0
    %112 = vmatprep.mubr.bf16.mxu0 0
    %113 = vmatmul.mubr.bf16.gmra.mrb[0].mxu0 %v78
    %v114 = vpop.f32.mrb[0].mxu0
    %v115 = vadd.f32 0.0, %v114
    %v116 = vpop.f32.mrb[0].mxu0
    %v117 = vpop.f32.mrb[0].mxu0
    %v118 = vadd.f32 0.0, %v117
    %v119 = vpop.f32.mrb[0].mxu0
    %120 = vdwg.mxu0
    %v121 = vadd.f32 %v51, %v115
    %v122 = vadd.f32 %v52, %v118
    %vm123 = vcmask 785408
    %124 = vst.msk [vmem:[#allocation2] sm:$0xff] %vm123, %v121
    %125 = vst.msk [vmem:[#allocation2 + $0x8] sm:$0xff] %vm123, %v122
    // Predicated region
    $region26: #{tpu_custom_call.1} parent=1 // pred_check
      %p126 = pneg %p44
    $region27: #{tpu_custom_call.1} parent=1 // pred_check_branch
      %128 = sbr.rel (%p126) target = $region29
    $region28: #{tpu_custom_call.1} parent=1 // pred_region
      %v129 = vld [vmem:[#allocation2] sm:$0xff]
      %v130 = vld [vmem:[#allocation2 + $0x8] sm:$0xff]
      %v131 = vld [vmem:[%s2] sm:$0x1]
      %v133 = vlaneseq
      %v134 = vshrl.u32 %v133, 7
      %v135 = vsub.s32 0, %v134
      %v136 = vrot.slane %v131, %v135
      %v138 = vadd.f32 %v129, %v136
      %v139 = vadd.f32 %v130, %v136
      %v140 = vpack.c.bf16 %v139, %v138
      %v142 = vunpack.c.l.b16 %v140
      %v143 = vunpack.c.h.b16 %v140
      %v144 = vpack.c.b16 %v142, %v142
      %v145 = vpack.c.b16 %v143, %v143
      %vm148 = vcmask 781312
      %149 = vst.msk [vmem:[#allocation8] sm:$0xf] %vm148, %v144
      %150 = vst.msk [vmem:[#allocation8 + $0x4] sm:$0xf] %vm148, %v145
    $region29: #{tpu_custom_call.1} parent=1 // pred_fallthru
      _
    // Predicated region
    $region30: #{tpu_custom_call.1} parent=1 // pred_check
      _
    $region31: #{tpu_custom_call.1} parent=1 // pred_check_branch
      %152 = sbr.rel (0) target = $region33
    $region32: #{tpu_custom_call.1} parent=1 // pred_region
      %s154 = ssub.s32 128, 128
      %155 = vsyncadd [#allocation5], %s154
      %s156 = sshll.u32 [#allocation8], 4
      %s157 = int_to_ptr.vmem [resolvable:$true] %s156
      %162 = dma.vmem_to_hbm [thread:$0]  %s157, 128, %s3, [#allocation5], 64, 64, 4
    $region33: #{tpu_custom_call.1} parent=1 // pred_fallthru
      _
    // Predicated region
    $region34: #{tpu_custom_call.1} parent=1 // pred_check
      _
    $region35: #{tpu_custom_call.1} parent=1 // pred_check_branch
      %164 = sbr.rel (0) target = $region37
    $region36: #{tpu_custom_call.1} parent=1 // pred_region
      %165 = dma.done [#allocation5], 128
    $region37: #{tpu_custom_call.1} parent=1 // pred_fallthru
      _
    %166 = vsyncpa [#allocation4], 1
    %167 = vsyncpa [#allocation7], 1
    %168 = vsyncpa [#allocation5], 1

</llo_original>
